<compile_context>
chip_gen: v5e
topology: v5e:2x2
jax: 0.10.0
libtpu: 0.0.40
codegen_flags: <defaults>
</compile_context>

<pallas_src>
import functools
import random as pyrandom

import jax
import jax.numpy as jnp
from jax import lax
from jax.experimental import pallas as pl
from jax.experimental.pallas import tpu as pltpu

_LANE = 128
_SUBLANE = 8
_NEG_INF = float("-inf")


def _round_up(x, m):
    return (x + m - 1) // m * m


def _pad_to(x, axis, size):
    pad = size - x.shape[axis]
    if pad == 0:
        return x
    widths = [(0, 0)] * x.ndim
    widths[axis] = (0, pad)
    return jnp.pad(x, widths)


def _attn_head_kernel(glb_ref,                      # SMEM (num_glbl,) int32  (scalar prefetch)
                      q_ref, k_ref, v_ref,          # (Tq,Dip) / (Sp,Dip) / (Sp,Dip)  bf16
                      wq_ref, bq_ref, wk_ref, wv_ref, bv_ref,
                      o_ref,                        # (Tq, Dkp) f32
                      *, seq_len, dim_k, num_glbl):
    f32 = jnp.float32
    bf16 = jnp.bfloat16
    tq = q_ref.shape[0]
    s_pad = k_ref.shape[0]
    scale = 1.0 / (float(dim_k) ** 0.5)

    # --- Projections (MXU, bf16 operands, f32 accumulation). ----------------
    # 1/sqrt(dim_k) folded into Q: mask entries are {0,-inf}, so the original
    # "(scores+mask)/sqrt(dk)" is reproduced exactly.  K bias dropped: softmax
    # over keys is exactly shift-invariant to a per-query-row constant.
    q_proj = (jnp.dot(q_ref[...], wq_ref[...], preferred_element_type=f32)
              + bq_ref[...]) * scale
    k_proj = jnp.dot(k_ref[...], wk_ref[...], preferred_element_type=f32)
    v_proj = jnp.dot(v_ref[...], wv_ref[...], preferred_element_type=f32) + bv_ref[...]

    # --- Q @ K^T: contract last dims of both operands (no transpose). -------
    scores = lax.dot_general(q_proj.astype(bf16), k_proj.astype(bf16),
                             (((1,), (1,)), ((), ())),
                             preferred_element_type=f32)            # (Tq, Sp)

    # --- Causal + global-token mask, generated in-kernel (no (S,S) DMA). ----
    q_start = pl.program_id(1) * tq
    row_ids = q_start + lax.broadcasted_iota(jnp.int32, (tq, s_pad), 0)
    col_ids = lax.broadcasted_iota(jnp.int32, (tq, s_pad), 1)
    keep = col_ids <= row_ids                       # lower-triangular (causal)
    for g in range(num_glbl):                       # tiny static unrolled loop
        g_idx = glb_ref[g]
        keep = keep | (col_ids == g_idx) | (row_ids == g_idx)
    if s_pad != seq_len:                            # exclude zero-padded keys
        keep = keep & (col_ids < seq_len)
    scores = jnp.where(keep, scores, _NEG_INF)

    # --- Softmax with deferred normalization (scale after the PV matmul). ---
    m = jnp.max(scores, axis=-1, keepdims=True)     # every row has a finite entry
    p = jnp.exp(scores - m)                                          # (Tq, Sp)
    l = jnp.sum(p, axis=-1, keepdims=True)                           # (Tq, 1)
    pv = jnp.dot(p.astype(bf16), v_proj.astype(bf16),
                 preferred_element_type=f32)                         # (Tq, Dkp)
    o_ref[...] = (pv * pl.reciprocal(l, approx=True)).astype(o_ref.dtype)


def attention_head(q, k, v, wq, bq, wk, bk, wv, bv, global_tokens, *, q_tile=256):
    """q/k/v: (B, S, dim_in); w*: (dim_in, dim); b*: (1, dim);
    global_tokens: python ints (< S) whose mask rows/cols are un-masked."""
    B, S, dim_in = q.shape
    dim_q, dim_k = wq.shape[1], wk.shape[1]
    # bk accepted for nn.Linear API parity; provably redundant under softmax.
    del bk

    # Padded (TPU-friendly) sizes.
    dip = _round_up(dim_in, _SUBLANE)
    dqp = _round_up(dim_q, _LANE)
    dkp = _round_up(dim_k, _LANE)
    sp = _round_up(S, _SUBLANE)
    tq = min(q_tile, sp)
    sp = _round_up(sp, tq)
    n_q_tiles = sp // tq

    bf16 = jnp.bfloat16
    qp = _pad_to(_pad_to(q, 2, dip), 1, sp).astype(bf16)
    kp = _pad_to(_pad_to(k, 2, dip), 1, sp).astype(bf16)
    vp = _pad_to(_pad_to(v, 2, dip), 1, sp).astype(bf16)
    wqp = _pad_to(_pad_to(wq, 0, dip), 1, dqp).astype(bf16)
    wkp = _pad_to(_pad_to(wk, 0, dip), 1, dkp).astype(bf16)
    wvp = _pad_to(_pad_to(wv, 0, dip), 1, dkp).astype(bf16)
    bqp = _pad_to(bq, 1, dqp).astype(jnp.float32)
    bvp = _pad_to(bv, 1, dkp).astype(jnp.float32)

    glb_list = [int(g) for g in global_tokens]
    num_glbl = len(glb_list)
    glb = jnp.asarray(glb_list if num_glbl else [0], dtype=jnp.int32)

    kernel = functools.partial(_attn_head_kernel, seq_len=S, dim_k=dim_k,
                               num_glbl=num_glbl)

    # Per-(batch, q-tile) blocks; index_maps receive the scalar-prefetch ref
    # as a trailing positional argument.
    q_spec = pl.BlockSpec((None, tq, dip), lambda b, t, g: (b, t, 0))
    kv_spec = pl.BlockSpec((None, sp, dip), lambda b, t, g: (b, 0, 0))
    out_spec = pl.BlockSpec((None, tq, dkp), lambda b, t, g: (b, t, 0))
    # Batch-invariant operands: constant block index -> fetched once.
    rep = lambda a: pl.BlockSpec(a.shape, lambda b, t, g: (0,) * a.ndim)

    flops = 2 * B * n_q_tiles * (tq * dip * dqp + 2 * sp * dip * dkp
                                 + tq * sp * dqp + tq * sp * dkp)
    transcendentals = B * sp * (sp + 1)
    bytes_accessed = (2 * B * sp * dip * (1 + 2 * n_q_tiles)
                      + 2 * dip * (dqp + 2 * dkp) + 4 * (dqp + dkp)
                      + 4 * B * sp * dkp)

    out = pl.pallas_call(
        kernel,
        out_shape=jax.ShapeDtypeStruct((B, sp, dkp), jnp.float32),
        grid_spec=pltpu.PrefetchScalarGridSpec(
            num_scalar_prefetch=1,
            grid=(B, n_q_tiles),
            in_specs=[q_spec, kv_spec, kv_spec,
                      rep(wqp), rep(bqp), rep(wkp), rep(wvp), rep(bvp)],
            out_specs=out_spec),
        compiler_params=pltpu.CompilerParams(
            dimension_semantics=("parallel", "parallel")),
        cost_estimate=pl.CostEstimate(flops=flops,
                                      transcendentals=transcendentals,
                                      bytes_accessed=bytes_accessed),
    )(glb, qp, kp, vp, wqp, bqp, wkp, wvp, bvp)

    return out[:, :S, :dim_k]


def create_mask(seq_len, global_tokens):
    """Dense reference mask: 0 on/below diag, -inf above, global rows/cols 0."""
    tri = jnp.tril(jnp.ones((seq_len, seq_len), jnp.float32))
    mask = jnp.where(tri == 0, jnp.float32(-jnp.inf), jnp.float32(0.0))
    for g in global_tokens:
        mask = mask.at[:, g].set(0.0)
        mask = mask.at[g, :].set(0.0)
    return mask


def _reference(q, k, v, wq, bq, wk, bk, wv, bv, mask):
    Q = q @ wq + bq
    K = k @ wk + bk           # reference keeps bk (kernel provably may drop it)
    V = v @ wv + bv
    num = jnp.einsum("bqd,bkd->bqk", Q, K)
    denom = K.shape[-1] ** 0.5
    p = jax.nn.softmax((num + mask) / denom, axis=-1)
    return p @ V


if __name__ == "__main__":
    B, S = 2, 8
    dim_in, dim_q, dim_k = 32, 16, 16
    num_rand_glbl_tkns = 2

    key = jax.random.PRNGKey(0)
    ks = jax.random.split(key, 9)
    q = jax.random.normal(ks[0], (B, S, dim_in), dtype=jnp.float32)
    k = jax.random.normal(ks[1], (B, S, dim_in), dtype=jnp.float32)
    v = jax.random.normal(ks[2], (B, S, dim_in), dtype=jnp.float32)

    # Deterministic "nn.Linear" init (uniform with torch-like scale).
    bound = 1.0 / (dim_in ** 0.5)
    uni = lambda kk, shape: jax.random.uniform(kk, shape, minval=-bound,
                                               maxval=bound, dtype=jnp.float32)
    wq, bq = uni(ks[3], (dim_in, dim_q)), uni(ks[4], (1, dim_q))
    wk, bk = uni(ks[5], (dim_in, dim_k)), uni(ks[6], (1, dim_k))
    wv, bv = uni(ks[7], (dim_in, dim_k)), uni(ks[8], (1, dim_k))

    # The module caches global_tokens / mask in Python globals; replicate that
    # host-side with a fixed seed so the run is deterministic.
    global_tokens = pyrandom.Random(0).sample(range(S), num_rand_glbl_tkns)

    out = attention_head(q, k, v, wq, bq, wk, bk, wv, bv, global_tokens)
    out = jax.block_until_ready(out)

    mask = create_mask(S, global_tokens)
    ref = _reference(q, k, v, wq, bq, wk, bk, wv, bv, mask)
    assert out.shape == (B, S, dim_k)
    # bf16 MXU operands + approx softmax reciprocal => ~1e-2-level error vs
    # the pure-f32 reference.
    assert jnp.allclose(out, ref, atol=3e-2, rtol=3e-2), "mismatch vs JAX reference"

    print("KERNEL_OK")
</pallas_src>

<mosaic_0001>
module attributes {stable_mosaic.version = 11 : i64} {
  func.func @_attn_head_kernel(%arg0: i32, %arg1: i32, %arg2: memref<2xi32, #tpu.memory_space<smem>>, %arg3: memref<1x8x32xbf16, #tpu.memory_space<vmem>>, %arg4: memref<1x8x32xbf16, #tpu.memory_space<vmem>>, %arg5: memref<1x8x32xbf16, #tpu.memory_space<vmem>>, %arg6: memref<32x128xbf16, #tpu.memory_space<vmem>>, %arg7: memref<1x128xf32, #tpu.memory_space<vmem>>, %arg8: memref<32x128xbf16, #tpu.memory_space<vmem>>, %arg9: memref<32x128xbf16, #tpu.memory_space<vmem>>, %arg10: memref<1x128xf32, #tpu.memory_space<vmem>>, %arg11: memref<1x8x128xf32, #tpu.memory_space<vmem>>) attributes {dimension_semantics = [#tpu.dimension_semantics<parallel>, #tpu.dimension_semantics<parallel>], iteration_bounds = array<i64: 2, 1>, scalar_prefetch = 1 : i64, scratch_operands = 0 : i64, tpu.core_type = #tpu.core_type<tc>, window_params = [{transform_indices = @transform_0, window_bounds = array<i64: 1, 8, 32>}, {transform_indices = @transform_1, window_bounds = array<i64: 1, 8, 32>}, {transform_indices = @transform_2, window_bounds = array<i64: 1, 8, 32>}, {pipeline_mode = #tpu.pipeline_mode<synchronous>, transform_indices = @transform_3, window_bounds = array<i64: 32, 128>}, {pipeline_mode = #tpu.pipeline_mode<synchronous>, transform_indices = @transform_4, window_bounds = array<i64: 1, 128>}, {pipeline_mode = #tpu.pipeline_mode<synchronous>, transform_indices = @transform_5, window_bounds = array<i64: 32, 128>}, {pipeline_mode = #tpu.pipeline_mode<synchronous>, transform_indices = @transform_6, window_bounds = array<i64: 32, 128>}, {pipeline_mode = #tpu.pipeline_mode<synchronous>, transform_indices = @transform_7, window_bounds = array<i64: 1, 128>}, {transform_indices = @transform_8, window_bounds = array<i64: 1, 8, 128>}]} {
    %c0 = arith.constant 0 : index
    %c0_0 = arith.constant 0 : index
    %c0_1 = arith.constant 0 : index
    %0 = vector.load %arg3[%c0, %c0_0, %c0_1] : memref<1x8x32xbf16, #tpu.memory_space<vmem>>, vector<1x8x32xbf16>
    %1 = vector.shape_cast %0 : vector<1x8x32xbf16> to vector<8x32xbf16>
    %c0_2 = arith.constant 0 : index
    %c0_3 = arith.constant 0 : index
    %2 = vector.load %arg6[%c0_2, %c0_3] : memref<32x128xbf16, #tpu.memory_space<vmem>>, vector<32x128xbf16>
    %cst = arith.constant dense<0.000000e+00> : vector<8x128xf32>
    %3 = tpu.matmul %1, %2, %cst {dimension_numbers = #tpu.dot_dimension_numbers<[1], [0], [0], [1], [0, 0, 1, 1], [], []>} : vector<8x32xbf16>, vector<32x128xbf16>, vector<8x128xf32> -> vector<8x128xf32>
    %c0_4 = arith.constant 0 : index
    %c0_5 = arith.constant 0 : index
    %4 = vector.load %arg7[%c0_4, %c0_5] : memref<1x128xf32, #tpu.memory_space<vmem>>, vector<1x128xf32>
    %5 = vector.broadcast %4 : vector<1x128xf32> to vector<8x128xf32>
    %6 = arith.addf %3, %5 : vector<8x128xf32>
    %cst_6 = arith.constant 2.500000e-01 : f32
    %7 = vector.broadcast %cst_6 : f32 to vector<8x128xf32>
    %8 = arith.mulf %6, %7 : vector<8x128xf32>
    %c0_7 = arith.constant 0 : index
    %c0_8 = arith.constant 0 : index
    %c0_9 = arith.constant 0 : index
    %9 = vector.load %arg4[%c0_7, %c0_8, %c0_9] : memref<1x8x32xbf16, #tpu.memory_space<vmem>>, vector<1x8x32xbf16>
    %10 = vector.shape_cast %9 : vector<1x8x32xbf16> to vector<8x32xbf16>
    %c0_10 = arith.constant 0 : index
    %c0_11 = arith.constant 0 : index
    %11 = vector.load %arg8[%c0_10, %c0_11] : memref<32x128xbf16, #tpu.memory_space<vmem>>, vector<32x128xbf16>
    %cst_12 = arith.constant dense<0.000000e+00> : vector<8x128xf32>
    %12 = tpu.matmul %10, %11, %cst_12 {dimension_numbers = #tpu.dot_dimension_numbers<[1], [0], [0], [1], [0, 0, 1, 1], [], []>} : vector<8x32xbf16>, vector<32x128xbf16>, vector<8x128xf32> -> vector<8x128xf32>
    %c0_13 = arith.constant 0 : index
    %c0_14 = arith.constant 0 : index
    %c0_15 = arith.constant 0 : index
    %13 = vector.load %arg5[%c0_13, %c0_14, %c0_15] : memref<1x8x32xbf16, #tpu.memory_space<vmem>>, vector<1x8x32xbf16>
    %14 = vector.shape_cast %13 : vector<1x8x32xbf16> to vector<8x32xbf16>
    %c0_16 = arith.constant 0 : index
    %c0_17 = arith.constant 0 : index
    %15 = vector.load %arg9[%c0_16, %c0_17] : memref<32x128xbf16, #tpu.memory_space<vmem>>, vector<32x128xbf16>
    %cst_18 = arith.constant dense<0.000000e+00> : vector<8x128xf32>
    %16 = tpu.matmul %14, %15, %cst_18 {dimension_numbers = #tpu.dot_dimension_numbers<[1], [0], [0], [1], [0, 0, 1, 1], [], []>} : vector<8x32xbf16>, vector<32x128xbf16>, vector<8x128xf32> -> vector<8x128xf32>
    %c0_19 = arith.constant 0 : index
    %c0_20 = arith.constant 0 : index
    %17 = vector.load %arg10[%c0_19, %c0_20] : memref<1x128xf32, #tpu.memory_space<vmem>>, vector<1x128xf32>
    %18 = vector.broadcast %17 : vector<1x128xf32> to vector<8x128xf32>
    %19 = arith.addf %16, %18 : vector<8x128xf32>
    %20 = arith.truncf %8 : vector<8x128xf32> to vector<8x128xbf16>
    %21 = arith.truncf %12 : vector<8x128xf32> to vector<8x128xbf16>
    %cst_21 = arith.constant dense<0.000000e+00> : vector<8x8xf32>
    %22 = tpu.matmul %20, %21, %cst_21 {dimension_numbers = #tpu.dot_dimension_numbers<[1], [1], [0], [0], [0, 0, 1, 0], [], []>} : vector<8x128xbf16>, vector<8x128xbf16>, vector<8x8xf32> -> vector<8x8xf32>
    %c8_i32 = arith.constant 8 : i32
    %23 = arith.muli %arg1, %c8_i32 : i32
    %24 = tpu.iota {dimensions = array<i32: 0>} : vector<8x8xi32>
    %25 = vector.broadcast %23 : i32 to vector<8x8xi32>
    %26 = arith.addi %25, %24 : vector<8x8xi32>
    %27 = tpu.iota {dimensions = array<i32: 1>} : vector<8x8xi32>
    %28 = arith.cmpi sle, %27, %26 : vector<8x8xi32>
    %c0_22 = arith.constant 0 : index
    %29 = memref.load %arg2[%c0_22] : memref<2xi32, #tpu.memory_space<smem>>
    %30 = vector.broadcast %29 : i32 to vector<8x8xi32>
    %31 = arith.cmpi eq, %27, %30 : vector<8x8xi32>
    %32 = arith.ori %28, %31 : vector<8x8xi1>
    %33 = vector.broadcast %29 : i32 to vector<8x8xi32>
    %34 = arith.cmpi eq, %26, %33 : vector<8x8xi32>
    %35 = arith.ori %32, %34 : vector<8x8xi1>
    %c1 = arith.constant 1 : index
    %36 = memref.load %arg2[%c1] : memref<2xi32, #tpu.memory_space<smem>>
    %37 = vector.broadcast %36 : i32 to vector<8x8xi32>
    %38 = arith.cmpi eq, %27, %37 : vector<8x8xi32>
    %39 = arith.ori %35, %38 : vector<8x8xi1>
    %40 = vector.broadcast %36 : i32 to vector<8x8xi32>
    %41 = arith.cmpi eq, %26, %40 : vector<8x8xi32>
    %42 = arith.ori %39, %41 : vector<8x8xi1>
    %cst_23 = arith.constant 0xFF800000 : f32
    %43 = vector.broadcast %cst_23 : f32 to vector<8x8xf32>
    %44 = arith.select %42, %22, %43 : vector<8x8xi1>, vector<8x8xf32>
    %cst_24 = arith.constant dense<0xFF800000> : vector<8xf32>
    %45 = vector.multi_reduction <maximumf>, %44, %cst_24 [1] : vector<8x8xf32> to vector<8xf32>
    %46 = vector.shape_cast %45 : vector<8xf32> to vector<8x1xf32>
    %47 = vector.broadcast %46 : vector<8x1xf32> to vector<8x8xf32>
    %48 = arith.subf %44, %47 : vector<8x8xf32>
    %49 = math.exp %48 : vector<8x8xf32>
    %cst_25 = arith.constant dense<0.000000e+00> : vector<8xf32>
    %50 = vector.multi_reduction <add>, %49, %cst_25 [1] : vector<8x8xf32> to vector<8xf32>
    %51 = vector.shape_cast %50 : vector<8xf32> to vector<8x1xf32>
    %52 = arith.truncf %49 : vector<8x8xf32> to vector<8x8xbf16>
    %53 = arith.truncf %19 : vector<8x128xf32> to vector<8x128xbf16>
    %cst_26 = arith.constant dense<0.000000e+00> : vector<8x128xf32>
    %54 = tpu.matmul %52, %53, %cst_26 {dimension_numbers = #tpu.dot_dimension_numbers<[1], [0], [0], [1], [0, 0, 1, 1], [], []>} : vector<8x8xbf16>, vector<8x128xbf16>, vector<8x128xf32> -> vector<8x128xf32>
    %55 = tpu.reciprocal %51 {approx = true} : vector<8x1xf32> -> vector<8x1xf32>
    %56 = vector.broadcast %55 : vector<8x1xf32> to vector<8x128xf32>
    %57 = arith.mulf %54, %56 : vector<8x128xf32>
    %c0_27 = arith.constant 0 : index
    %c0_28 = arith.constant 0 : index
    %c0_29 = arith.constant 0 : index
    %58 = vector.load %arg11[%c0_27, %c0_28, %c0_29] : memref<1x8x128xf32, #tpu.memory_space<vmem>>, vector<1x8x128xf32>
    %59 = vector.shape_cast %58 : vector<1x8x128xf32> to vector<8x128xf32>
    %60 = vector.shape_cast %57 : vector<8x128xf32> to vector<1x8x128xf32>
    tpu.vector_store %arg11[%c0_27, %c0_28, %c0_29], %60 {strides = array<i32>} : memref<1x8x128xf32, #tpu.memory_space<vmem>>, vector<1x8x128xf32>,
    return
  }
  func.func @transform_0(%arg0: i32, %arg1: i32, %arg2: memref<2xi32, #tpu.memory_space<smem>>) -> (i32, i32, i32) {
    %c0_i32 = arith.constant 0 : i32
    %c0_i32_0 = arith.constant 0 : i32
    return %arg0, %arg1, %c0_i32 : i32, i32, i32
  }
  func.func @transform_1(%arg0: i32, %arg1: i32, %arg2: memref<2xi32, #tpu.memory_space<smem>>) -> (i32, i32, i32) {
    %c0_i32 = arith.constant 0 : i32
    %c0_i32_0 = arith.constant 0 : i32
    %c0_i32_1 = arith.constant 0 : i32
    return %arg0, %c0_i32, %c0_i32_0 : i32, i32, i32
  }
  func.func @transform_2(%arg0: i32, %arg1: i32, %arg2: memref<2xi32, #tpu.memory_space<smem>>) -> (i32, i32, i32) {
    %c0_i32 = arith.constant 0 : i32
    %c0_i32_0 = arith.constant 0 : i32
    %c0_i32_1 = arith.constant 0 : i32
    return %arg0, %c0_i32, %c0_i32_0 : i32, i32, i32
  }
  func.func @transform_3(%arg0: i32, %arg1: i32, %arg2: memref<2xi32, #tpu.memory_space<smem>>) -> (i32, i32) {
    %c0_i32 = arith.constant 0 : i32
    %c0_i32_0 = arith.constant 0 : i32
    %c0_i32_1 = arith.constant 0 : i32
    return %c0_i32, %c0_i32_0 : i32, i32
  }
  func.func @transform_4(%arg0: i32, %arg1: i32, %arg2: memref<2xi32, #tpu.memory_space<smem>>) -> (i32, i32) {
    %c0_i32 = arith.constant 0 : i32
    %c0_i32_0 = arith.constant 0 : i32
    %c0_i32_1 = arith.constant 0 : i32
    return %c0_i32, %c0_i32_0 : i32, i32
  }
  func.func @transform_5(%arg0: i32, %arg1: i32, %arg2: memref<2xi32, #tpu.memory_space<smem>>) -> (i32, i32) {
    %c0_i32 = arith.constant 0 : i32
    %c0_i32_0 = arith.constant 0 : i32
    %c0_i32_1 = arith.constant 0 : i32
    return %c0_i32, %c0_i32_0 : i32, i32
  }
  func.func @transform_6(%arg0: i32, %arg1: i32, %arg2: memref<2xi32, #tpu.memory_space<smem>>) -> (i32, i32) {
    %c0_i32 = arith.constant 0 : i32
    %c0_i32_0 = arith.constant 0 : i32
    %c0_i32_1 = arith.constant 0 : i32
    return %c0_i32, %c0_i32_0 : i32, i32
  }
  func.func @transform_7(%arg0: i32, %arg1: i32, %arg2: memref<2xi32, #tpu.memory_space<smem>>) -> (i32, i32) {
    %c0_i32 = arith.constant 0 : i32
    %c0_i32_0 = arith.constant 0 : i32
    %c0_i32_1 = arith.constant 0 : i32
    return %c0_i32, %c0_i32_0 : i32, i32
  }
  func.func @transform_8(%arg0: i32, %arg1: i32, %arg2: memref<2xi32, #tpu.memory_space<smem>>) -> (i32, i32, i32) {
    %c0_i32 = arith.constant 0 : i32
    %c0_i32_0 = arith.constant 0 : i32
    return %arg0, %arg1, %c0_i32 : i32, i32, i32
  }
}

</mosaic_0001>

<llo_original>
// kernel: tpu_custom_call.1
$region0: #{tpu_custom_call.1}
  #allocation0 [shape = 'u32[]', space=smem, size = 0x4, offset = 0x4, fixed_abs, tag = 'smem constant byte address 0x4 - core index']
  #allocation1 [shape = 'u32[72,128]{1,0:T(1,128)}', space=vmem, size = 0x9000, scoped, tag = 'internal scratch']
  #allocation2 [shape = 's32[1]{0}', space=sflag, size = 0x4, scoped, tag = 'scoped memory for tpu_custom_call.1']
  #allocation3 [shape = 'u8[512]{0}', space=smem, size = 0x200, scoped, tag = 'prefetched SMEM operand 0']
  %s0 = inlined_call_operand.hbm [shape: s32[2], index: 0, kind: input, shape index: {}]
  %s1 = inlined_call_operand.hbm [shape: bf16[2,8,32], index: 1, kind: input, shape index: {}]
  %s2 = inlined_call_operand.hbm [shape: bf16[2,8,32], index: 2, kind: input, shape index: {}]
  %s3 = inlined_call_operand.hbm [shape: bf16[2,8,32], index: 3, kind: input, shape index: {}]
  %s4 = inlined_call_operand.hbm [shape: bf16[32,128], index: 4, kind: input, shape index: {}]
  %s5 = inlined_call_operand.vmem [shape: f32[1,128], index: 5, kind: input, shape index: {}]
  %s6 = inlined_call_operand.hbm [shape: bf16[32,128], index: 6, kind: input, shape index: {}]
  %s7 = inlined_call_operand.hbm [shape: bf16[32,128], index: 7, kind: input, shape index: {}]
  %s8 = inlined_call_operand.vmem [shape: f32[1,128], index: 8, kind: input, shape index: {}]
  %s9 = inlined_call_operand.hbm [shape: f32[2,8,128], index: 9, kind: output, shape index: {}]
  %s10 = sld [smem:[#allocation0]]
  $region89: #{tpu_custom_call.1} parent=0
    _
  %s12 = ssub.s32 1, %s10
  %s13 = scalar_select 0, %s12, %s10
  %s15 = sshll.u32 %s0, 4
  %s16 = int_to_ptr.hbm [resolvable:$true] %s15
  %18 = dma.hbm_to_smem %s16, 16, [#allocation3], [#allocation2]
  %20 = dma.done [#allocation2], 16
  %21 = sfence
  $region1: #{tpu_custom_call.1} parent=0
    #allocation4 [shape = 'u8[4096]{0}', space=vmem, size = 0x1000, scoped, tag = 'input window, operand 1']
    #allocation5 [shape = 's32[2]{0}', space=sflag, size = 0x8, scoped, tag = 'scoped memory for tpu_custom_call.1']
    #allocation6 [shape = 's32[2]{0}', space=sflag, size = 0x8, scoped, tag = 'scoped memory for tpu_custom_call.1']
    #allocation7 [shape = 'u8[4096]{0}', space=vmem, size = 0x1000, scoped, tag = 'input window, operand 2']
    #allocation8 [shape = 's32[2]{0}', space=sflag, size = 0x8, scoped, tag = 'scoped memory for tpu_custom_call.1']
    #allocation9 [shape = 'u8[4096]{0}', space=vmem, size = 0x1000, scoped, tag = 'input window, operand 3']
    #allocation10 [shape = 'u8[8192]{0}', space=vmem, size = 0x2000, scoped, tag = 'input window, operand 4, single buffered']
    #allocation11 [shape = 's32[1]{0}', space=sflag, size = 0x4, scoped, tag = 'scoped memory for tpu_custom_call.1']
    #allocation12 [shape = 'u8[8192]{0}', space=vmem, size = 0x2000, scoped, tag = 'input window, operand 6, single buffered']
    #allocation13 [shape = 'u8[8192]{0}', space=vmem, size = 0x2000, scoped, tag = 'input window, operand 7, single buffered']
    #allocation14 [shape = 's32[1]{0}', space=sflag, size = 0x4, scoped, tag = 'scoped memory for tpu_custom_call.1']
    #allocation15 [shape = 'u8[8192]{0}', space=vmem, size = 0x2000, scoped, tag = 'output window, operand 0']
    %22 = vsyncpa [#allocation5], 0
    %s23 = scalar_lea.sflag [#allocation5], 1
    %24 = vsyncpa %s23, 0
    %25 = vsyncpa [#allocation8], 0
    %s26 = scalar_lea.sflag [#allocation8], 1
    %27 = vsyncpa %s26, 0
    %28 = vsyncpa [#allocation11], 0
    %29 = vsyncpa [#allocation14], 0
    %30 = vsyncpa [#allocation6], 0
    %s31 = scalar_lea.sflag [#allocation6], 1
    %32 = vsyncpa %s31, 0
    loop: start=0, step=1, limit=4
    $region2: #{tpu_custom_call.1} parent=1 // loop_pre_header
      _
    $region3: #{tpu_custom_call.1} parent=1 // loop_header
      %s34 = sphi 0, %s38
      %p35 = scmp.ge.s32.totalorder %s34, 4
      %s41 = sphi 0, %s53
      %s42 = sphi 0, %s49
      %s43 = sphi 0, %s41
      %s44 = sphi 0, %s42
      %s45 = sphi 0, %s43
      %s46 = sphi 0, %s44
      %s58 = sphi 0, %s60
      %s61 = sphi 0, %s58
      %s62 = sphi 0, %s61
      %s78 = sphi 0, %s62
      %s84 = sphi 0, %s86
      %s87 = sphi 0, %s84
      %s88 = sphi 0, %s87
      %s104 = sphi 0, %s88
      %s110 = sphi 0, %s112
      %s113 = sphi 0, %s110
      %s114 = sphi 0, %s113
      %s130 = sphi 0, %s114
      %s134 = sphi 0, %s134
      %s136 = sphi 0, %s134
      %s137 = sphi 0, %s136
      %s151 = sphi 0, %s137
      %s155 = sphi 0, %s155
      %s157 = sphi 0, %s155
      %s158 = sphi 0, %s157
      %s172 = sphi 0, %s158
      %s176 = sphi 0, %s176
      %s178 = sphi 0, %s176
      %s179 = sphi 0, %s178
      %s193 = sphi 0, %s179
      %s197 = sphi 0, %s197
      %s199 = sphi 0, %s197
      %s200 = sphi 0, %s199
      %s214 = sphi 0, %s200
      %s218 = sphi 0, %s218
      %s220 = sphi 0, %s218
      %s221 = sphi 0, %s220
      %s235 = sphi 0, %s221
      %s243 = sphi 0, %s245
      %s246 = sphi 0, %s243
      %s247 = sphi 0, %s246
      %s263 = sphi 0, %s247
    $region4: #{tpu_custom_call.1} parent=1 // loop_header_branch
      %37 = sbr.rel (%p35) target = $region8
    $region5: #{tpu_custom_call.1} parent=1 // loop_body
      %s39 = ssub.s32 %s34, 1
      %s40 = ssub.s32 %s34, 2
      %s47 = sadd.s32 1, %s42
      %p48 = scmp.ge.s32.totalorder %s47, 1
      %s49 = scalar_select %p48, 0, %s47
      %s50 = sadd.s32 1, %s41
      %s51 = scalar_select %p48, %s50, %s41
      %p52 = scmp.ge.s32.totalorder %s51, 2
      %s53 = scalar_select %p52, 0, %s51
      %s54 = ssub.s32 %s41, %s53
      %s55 = ssub.s32 %s42, %s49
      %s56 = sor.u32 %s54, %s55
      %p57 = scmp.eq.s32.totalorder %s56, 0
      %s59 = sadd.s32 %s58, 1
      %s60 = scalar_select %p57, %s58, %s59
      %p63 = pneg %p57
      %p64 = scmp.eq.s32.totalorder %s34, 1
      %p65 = por %p63, %p64
      %p66 = scmp.ne.s32.totalorder %s58, %s61
      %p67 = scmp.eq.s32.totalorder %s34, 0
      %p68 = por %p66, %p67
      %p69 = scmp.ne.s32.totalorder %s58, %s61
      %p70 = scmp.eq.s32.totalorder %s39, 1
      %p71 = por %p69, %p70
      %p72 = scmp.ne.s32.totalorder %s61, %s62
      %p73 = scmp.eq.s32.totalorder %s39, 0
      %p74 = por %p72, %p73
      %p75 = scmp.ne.s32.totalorder %s61, %s62
      %p76 = scmp.eq.s32.totalorder %s40, 1
      %p77 = por %p75, %p76
      %p79 = scmp.ne.s32.totalorder %s62, %s78
      %p80 = scmp.eq.s32.totalorder %s40, 0
      %p81 = por %p79, %p80
      %s82 = ssub.s32 %s41, %s53
      %p83 = scmp.eq.s32.totalorder %s82, 0
      %s85 = sadd.s32 %s84, 1
      %s86 = scalar_select %p83, %s84, %s85
      %p89 = pneg %p83
      %p90 = scmp.eq.s32.totalorder %s34, 1
      %p91 = por %p89, %p90
      %p92 = scmp.ne.s32.totalorder %s84, %s87
      %p93 = scmp.eq.s32.totalorder %s34, 0
      %p94 = por %p92, %p93
      %p95 = scmp.ne.s32.totalorder %s84, %s87
      %p96 = scmp.eq.s32.totalorder %s39, 1
      %p97 = por %p95, %p96
      %p98 = scmp.ne.s32.totalorder %s87, %s88
      %p99 = scmp.eq.s32.totalorder %s39, 0
      %p100 = por %p98, %p99
      %p101 = scmp.ne.s32.totalorder %s87, %s88
      %p102 = scmp.eq.s32.totalorder %s40, 1
      %p103 = por %p101, %p102
      %p105 = scmp.ne.s32.totalorder %s88, %s104
      %p106 = scmp.eq.s32.totalorder %s40, 0
      %p107 = por %p105, %p106
      %s108 = ssub.s32 %s41, %s53
      %p109 = scmp.eq.s32.totalorder %s108, 0
      %s111 = sadd.s32 %s110, 1
      %s112 = scalar_select %p109, %s110, %s111
      %p115 = pneg %p109
      %p116 = scmp.eq.s32.totalorder %s34, 1
      %p117 = por %p115, %p116
      %p118 = scmp.ne.s32.totalorder %s110, %s113
      %p119 = scmp.eq.s32.totalorder %s34, 0
      %p120 = por %p118, %p119
      %p121 = scmp.ne.s32.totalorder %s110, %s113
      %p122 = scmp.eq.s32.totalorder %s39, 1
      %p123 = por %p121, %p122
      %p124 = scmp.ne.s32.totalorder %s113, %s114
      %p125 = scmp.eq.s32.totalorder %s39, 0
      %p126 = por %p124, %p125
      %p127 = scmp.ne.s32.totalorder %s113, %s114
      %p128 = scmp.eq.s32.totalorder %s40, 1
      %p129 = por %p127, %p128
      %p131 = scmp.ne.s32.totalorder %s114, %s130
      %p132 = scmp.eq.s32.totalorder %s40, 0
      %p133 = por %p131, %p132
      %s135 = sadd.s32 %s134, 1
      %p138 = scmp.eq.s32.totalorder %s34, 1
      %p139 = scmp.ne.s32.totalorder %s134, %s136
      %p140 = scmp.eq.s32.totalorder %s34, 0
      %p141 = por %p139, %p140
      %p142 = scmp.ne.s32.totalorder %s134, %s136
      %p143 = scmp.eq.s32.totalorder %s39, 1
      %p144 = por %p142, %p143
      %p145 = scmp.ne.s32.totalorder %s136, %s137
      %p146 = scmp.eq.s32.totalorder %s39, 0
      %p147 = por %p145, %p146
      %p148 = scmp.ne.s32.totalorder %s136, %s137
      %p149 = scmp.eq.s32.totalorder %s40, 1
      %p150 = por %p148, %p149
      %p152 = scmp.ne.s32.totalorder %s137, %s151
      %p153 = scmp.eq.s32.totalorder %s40, 0
      %p154 = por %p152, %p153
      %s156 = sadd.s32 %s155, 1
      %p159 = scmp.eq.s32.totalorder %s34, 1
      %p160 = scmp.ne.s32.totalorder %s155, %s157
      %p161 = scmp.eq.s32.totalorder %s34, 0
      %p162 = por %p160, %p161
      %p163 = scmp.ne.s32.totalorder %s155, %s157
      %p164 = scmp.eq.s32.totalorder %s39, 1
      %p165 = por %p163, %p164
      %p166 = scmp.ne.s32.totalorder %s157, %s158
      %p167 = scmp.eq.s32.totalorder %s39, 0
      %p168 = por %p166, %p167
      %p169 = scmp.ne.s32.totalorder %s157, %s158
      %p170 = scmp.eq.s32.totalorder %s40, 1
      %p171 = por %p169, %p170
      %p173 = scmp.ne.s32.totalorder %s158, %s172
      %p174 = scmp.eq.s32.totalorder %s40, 0
      %p175 = por %p173, %p174
      %s177 = sadd.s32 %s176, 1
      %p180 = scmp.eq.s32.totalorder %s34, 1
      %p181 = scmp.ne.s32.totalorder %s176, %s178
      %p182 = scmp.eq.s32.totalorder %s34, 0
      %p183 = por %p181, %p182
      %p184 = scmp.ne.s32.totalorder %s176, %s178
      %p185 = scmp.eq.s32.totalorder %s39, 1
      %p186 = por %p184, %p185
      %p187 = scmp.ne.s32.totalorder %s178, %s179
      %p188 = scmp.eq.s32.totalorder %s39, 0
      %p189 = por %p187, %p188
      %p190 = scmp.ne.s32.totalorder %s178, %s179
      %p191 = scmp.eq.s32.totalorder %s40, 1
      %p192 = por %p190, %p191
      %p194 = scmp.ne.s32.totalorder %s179, %s193
      %p195 = scmp.eq.s32.totalorder %s40, 0
      %p196 = por %p194, %p195
      %s198 = sadd.s32 %s197, 1
      %p201 = scmp.eq.s32.totalorder %s34, 1
      %p202 = scmp.ne.s32.totalorder %s197, %s199
      %p203 = scmp.eq.s32.totalorder %s34, 0
      %p204 = por %p202, %p203
      %p205 = scmp.ne.s32.totalorder %s197, %s199
      %p206 = scmp.eq.s32.totalorder %s39, 1
      %p207 = por %p205, %p206
      %p208 = scmp.ne.s32.totalorder %s199, %s200
      %p209 = scmp.eq.s32.totalorder %s39, 0
      %p210 = por %p208, %p209
      %p211 = scmp.ne.s32.totalorder %s199, %s200
      %p212 = scmp.eq.s32.totalorder %s40, 1
      %p213 = por %p211, %p212
      %p215 = scmp.ne.s32.totalorder %s200, %s214
      %p216 = scmp.eq.s32.totalorder %s40, 0
      %p217 = por %p215, %p216
      %s219 = sadd.s32 %s218, 1
      %p222 = scmp.eq.s32.totalorder %s34, 1
      %p223 = scmp.ne.s32.totalorder %s218, %s220
      %p224 = scmp.eq.s32.totalorder %s34, 0
      %p225 = por %p223, %p224
      %p226 = scmp.ne.s32.totalorder %s218, %s220
      %p227 = scmp.eq.s32.totalorder %s39, 1
      %p228 = por %p226, %p227
      %p229 = scmp.ne.s32.totalorder %s220, %s221
      %p230 = scmp.eq.s32.totalorder %s39, 0
      %p231 = por %p229, %p230
      %p232 = scmp.ne.s32.totalorder %s220, %s221
      %p233 = scmp.eq.s32.totalorder %s40, 1
      %p234 = por %p232, %p233
      %p236 = scmp.ne.s32.totalorder %s221, %s235
      %p237 = scmp.eq.s32.totalorder %s40, 0
      %p238 = por %p236, %p237
      %s239 = ssub.s32 %s41, %s53
      %s240 = ssub.s32 %s42, %s49
      %s241 = sor.u32 %s239, %s240
      %p242 = scmp.eq.s32.totalorder %s241, 0
      %s244 = sadd.s32 %s243, 1
      %s245 = scalar_select %p242, %s243, %s244
      %p248 = pneg %p242
      %p249 = scmp.eq.s32.totalorder %s34, 1
      %p250 = por %p248, %p249
      %p251 = scmp.ne.s32.totalorder %s243, %s246
      %p252 = scmp.eq.s32.totalorder %s34, 0
      %p253 = por %p251, %p252
      %p254 = scmp.ne.s32.totalorder %s243, %s246
      %p255 = scmp.eq.s32.totalorder %s39, 1
      %p256 = por %p254, %p255
      %p257 = scmp.ne.s32.totalorder %s246, %s247
      %p258 = scmp.eq.s32.totalorder %s39, 0
      %p259 = por %p257, %p258
      %p260 = scmp.ne.s32.totalorder %s246, %s247
      %p261 = scmp.eq.s32.totalorder %s40, 1
      %p262 = por %p260, %p261
      %p264 = scmp.ne.s32.totalorder %s247, %s263
      %p265 = scmp.eq.s32.totalorder %s40, 0
      %p266 = por %p264, %p265
      %p267 = scmp.le.s32.totalorder 1, %s34
      %p268 = scmp.lt.s32.totalorder %s34, 3
      %p269 = pnand %p267, %p268
      %p270 = pneg %p269
      // Predicated region
      $region9: #{tpu_custom_call.1} parent=5 // pred_check
        _
      $region10: #{tpu_custom_call.1} parent=5 // pred_check_branch
        %272 = sbr.rel (%p269) target = $region12
      $region11: #{tpu_custom_call.1} parent=5 // pred_region
        %s273 = ssub.s32 %s34, 1
        // Predicated region
        $region13: #{tpu_custom_call.1} parent=11 // pred_check
          %p274 = pneg %p147
        $region14: #{tpu_custom_call.1} parent=11 // pred_check_branch
          %276 = sbr.rel (%p274) target = $region16
        $region15: #{tpu_custom_call.1} parent=11 // pred_region
          %278 = vsyncadd [#allocation11], 0
          %s279 = sshll.u32 %s4, 4
          %s280 = int_to_ptr.hbm [resolvable:$true] %s279
          %s281 = sshll.u32 [#allocation10], 4
          %s282 = int_to_ptr.vmem [resolvable:$true] %s281
          %287 = dma.hbm_to_vmem [thread:$0]  %s280, 256, %s282, [#allocation11], 64, 64, 4
        $region16: #{tpu_custom_call.1} parent=11 // pred_fallthru
          _
        // Predicated region
        $region17: #{tpu_custom_call.1} parent=11 // pred_check
          %p288 = pneg %p168
        $region18: #{tpu_custom_call.1} parent=11 // pred_check_branch
          %290 = sbr.rel (%p288) target = $region20
        $region19: #{tpu_custom_call.1} parent=11 // pred_region
          _
        $region20: #{tpu_custom_call.1} parent=11 // pred_fallthru
          _
        // Predicated region
        $region21: #{tpu_custom_call.1} parent=11 // pred_check
          %p291 = pneg %p189
        $region22: #{tpu_custom_call.1} parent=11 // pred_check_branch
          %293 = sbr.rel (%p291) target = $region24
        $region23: #{tpu_custom_call.1} parent=11 // pred_region
          %295 = vsyncadd [#allocation11], 0
          %s296 = sshll.u32 %s6, 4
          %s297 = int_to_ptr.hbm [resolvable:$true] %s296
          %s298 = sshll.u32 [#allocation12], 4
          %s299 = int_to_ptr.vmem [resolvable:$true] %s298
          %304 = dma.hbm_to_vmem [thread:$0]  %s297, 256, %s299, [#allocation11], 64, 64, 4
        $region24: #{tpu_custom_call.1} parent=11 // pred_fallthru
          _
        // Predicated region
        $region25: #{tpu_custom_call.1} parent=11 // pred_check
          %p305 = pneg %p210
        $region26: #{tpu_custom_call.1} parent=11 // pred_check_branch
          %307 = sbr.rel (%p305) target = $region28
        $region27: #{tpu_custom_call.1} parent=11 // pred_region
          %309 = vsyncadd [#allocation14], 0
          %s310 = sshll.u32 %s7, 4
          %s311 = int_to_ptr.hbm [resolvable:$true] %s310
          %s312 = sshll.u32 [#allocation13], 4
          %s313 = int_to_ptr.vmem [resolvable:$true] %s312
          %318 = dma.hbm_to_vmem [thread:$0]  %s311, 256, %s313, [#allocation14], 64, 64, 4
        $region28: #{tpu_custom_call.1} parent=11 // pred_fallthru
          _
        // Predicated region
        $region29: #{tpu_custom_call.1} parent=11 // pred_check
          %p319 = pneg %p231
        $region30: #{tpu_custom_call.1} parent=11 // pred_check_branch
          %321 = sbr.rel (%p319) target = $region32
        $region31: #{tpu_custom_call.1} parent=11 // pred_region
          _
        $region32: #{tpu_custom_call.1} parent=11 // pred_fallthru
          _
      $region12: #{tpu_custom_call.1} parent=5 // pred_fallthru
        _
      %p322 = scmp.lt.s32.totalorder %s34, 2
      // Predicated region
      $region33: #{tpu_custom_call.1} parent=5 // pred_check
        %p323 = pneg %p322
      $region34: #{tpu_custom_call.1} parent=5 // pred_check_branch
        %325 = sbr.rel (%p323) target = $region36
      $region35: #{tpu_custom_call.1} parent=5 // pred_region
        // Predicated region
        $region37: #{tpu_custom_call.1} parent=35 // pred_check
          %p326 = pneg %p68
        $region38: #{tpu_custom_call.1} parent=35 // pred_check_branch
          %328 = sbr.rel (%p326) target = $region40
        $region39: #{tpu_custom_call.1} parent=35 // pred_region
          %s329 = sand.u32 %s58, 1
          %s330 = scalar_lea.sflag [#allocation5], %s329
          %s331 = sand.u32 %s58, 1
          %s332 = smul.addr %s331, 4
          %s333 = scalar_lea.vmem [#allocation4], %s332
          %335 = vsyncadd %s330, 0
          %s336 = sadd.s32 %s42, %s41
          %s337 = smul.addr %s336, 4
          %s338 = scalar_lea.hbm %s1, %s337
          %s340 = sshll.u32 %s338, 4
          %s341 = int_to_ptr.hbm [resolvable:$true] %s340
          %s342 = sshll.u32 %s333, 4
          %s343 = int_to_ptr.vmem [resolvable:$true] %s342
          %345 = dma.hbm_to_vmem [thread:$0]  %s341, 64, %s343, %s330
        $region40: #{tpu_custom_call.1} parent=35 // pred_fallthru
          _
        // Predicated region
        $region41: #{tpu_custom_call.1} parent=35 // pred_check
          %p346 = pneg %p94
        $region42: #{tpu_custom_call.1} parent=35 // pred_check_branch
          %348 = sbr.rel (%p346) target = $region44
        $region43: #{tpu_custom_call.1} parent=35 // pred_region
          %s349 = sand.u32 %s34, 1
          %s350 = scalar_lea.sflag [#allocation8], %s349
          %s351 = sand.u32 %s84, 1
          %s352 = smul.addr %s351, 4
          %s353 = scalar_lea.vmem [#allocation7], %s352
          %355 = vsyncadd %s350, 0
          %s356 = smul.addr %s41, 4
          %s357 = scalar_lea.hbm %s2, %s356
          %s359 = sshll.u32 %s357, 4
          %s360 = int_to_ptr.hbm [resolvable:$true] %s359
          %s361 = sshll.u32 %s353, 4
          %s362 = int_to_ptr.vmem [resolvable:$true] %s361
          %364 = dma.hbm_to_vmem [thread:$0]  %s360, 64, %s362, %s350
        $region44: #{tpu_custom_call.1} parent=35 // pred_fallthru
          _
        // Predicated region
        $region45: #{tpu_custom_call.1} parent=35 // pred_check
          %p365 = pneg %p120
        $region46: #{tpu_custom_call.1} parent=35 // pred_check_branch
          %367 = sbr.rel (%p365) target = $region48
        $region47: #{tpu_custom_call.1} parent=35 // pred_region
          %s368 = sand.u32 %s34, 1
          %s369 = scalar_lea.sflag [#allocation8], %s368
          %s370 = sand.u32 %s110, 1
          %s371 = smul.addr %s370, 4
          %s372 = scalar_lea.vmem [#allocation9], %s371
          %374 = vsyncadd %s369, 0
          %s375 = smul.addr %s41, 4
          %s376 = scalar_lea.hbm %s3, %s375
          %s378 = sshll.u32 %s376, 4
          %s379 = int_to_ptr.hbm [resolvable:$true] %s378
          %s380 = sshll.u32 %s372, 4
          %s381 = int_to_ptr.vmem [resolvable:$true] %s380
          %383 = dma.hbm_to_vmem [thread:$0]  %s379, 64, %s381, %s369
        $region48: #{tpu_custom_call.1} parent=35 // pred_fallthru
          _
      $region36: #{tpu_custom_call.1} parent=5 // pred_fallthru
        _
      %p384 = scmp.le.s32.totalorder 1, %s34
      %p385 = scmp.lt.s32.totalorder %s34, 3
      %p386 = pnand %p384, %p385
      %p387 = pneg %p386
      // Predicated region
      $region49: #{tpu_custom_call.1} parent=5 // pred_check
        _
      $region50: #{tpu_custom_call.1} parent=5 // pred_check_branch
        %389 = sbr.rel (%p386) target = $region52
      $region51: #{tpu_custom_call.1} parent=5 // pred_region
        %s390 = ssub.s32 %s34, 1
        %s391 = sand.u32 %s61, 1
        %s392 = scalar_lea.sflag [#allocation5], %s391
        %s393 = sand.u32 %s61, 1
        %s394 = smul.addr %s393, 4
        %s395 = scalar_lea.vmem [#allocation4], %s394
        // Predicated region
        $region53: #{tpu_custom_call.1} parent=51 // pred_check
          %p396 = pneg %p74
        $region54: #{tpu_custom_call.1} parent=51 // pred_check_branch
          %398 = sbr.rel (%p396) target = $region56
        $region55: #{tpu_custom_call.1} parent=51 // pred_region
          %400 = dma.done %s392, 64
        $region56: #{tpu_custom_call.1} parent=51 // pred_fallthru
          _
        %s401 = sand.u32 %s39, 1
        %s402 = scalar_lea.sflag [#allocation8], %s401
        %s403 = sand.u32 %s87, 1
        %s404 = smul.addr %s403, 4
        %s405 = scalar_lea.vmem [#allocation7], %s404
        // Predicated region
        $region57: #{tpu_custom_call.1} parent=51 // pred_check
          %p406 = pneg %p100
        $region58: #{tpu_custom_call.1} parent=51 // pred_check_branch
          %408 = sbr.rel (%p406) target = $region60
        $region59: #{tpu_custom_call.1} parent=51 // pred_region
          %410 = dma.done %s402, 64
        $region60: #{tpu_custom_call.1} parent=51 // pred_fallthru
          _
        %s411 = sand.u32 %s39, 1
        %s412 = scalar_lea.sflag [#allocation8], %s411
        %s413 = sand.u32 %s113, 1
        %s414 = smul.addr %s413, 4
        %s415 = scalar_lea.vmem [#allocation9], %s414
        // Predicated region
        $region61: #{tpu_custom_call.1} parent=51 // pred_check
          %p416 = pneg %p126
        $region62: #{tpu_custom_call.1} parent=51 // pred_check_branch
          %418 = sbr.rel (%p416) target = $region64
        $region63: #{tpu_custom_call.1} parent=51 // pred_region
          %420 = dma.done %s412, 64
        $region64: #{tpu_custom_call.1} parent=51 // pred_fallthru
          _
        // Predicated region
        $region65: #{tpu_custom_call.1} parent=51 // pred_check
          %p421 = pneg %p147
        $region66: #{tpu_custom_call.1} parent=51 // pred_check_branch
          %423 = sbr.rel (%p421) target = $region68
        $region67: #{tpu_custom_call.1} parent=51 // pred_region
          %425 = dma.done [#allocation11], 256
        $region68: #{tpu_custom_call.1} parent=51 // pred_fallthru
          _
        // Predicated region
        $region69: #{tpu_custom_call.1} parent=51 // pred_check
          %p426 = pneg %p189
        $region70: #{tpu_custom_call.1} parent=51 // pred_check_branch
          %428 = sbr.rel (%p426) target = $region72
        $region71: #{tpu_custom_call.1} parent=51 // pred_region
          %430 = dma.done [#allocation11], 256
        $region72: #{tpu_custom_call.1} parent=51 // pred_fallthru
          _
        // Predicated region
        $region73: #{tpu_custom_call.1} parent=51 // pred_check
          %p431 = pneg %p210
        $region74: #{tpu_custom_call.1} parent=51 // pred_check_branch
          %433 = sbr.rel (%p431) target = $region76
        $region75: #{tpu_custom_call.1} parent=51 // pred_region
          %435 = dma.done [#allocation14], 256
        $region76: #{tpu_custom_call.1} parent=51 // pred_fallthru
          _
        %s436 = sand.u32 %s61, 1
        %s437 = scalar_lea.sflag [#allocation5], %s436
        %s438 = sand.u32 %s61, 1
        %s439 = smul.addr %s438, 4
        %s440 = scalar_lea.vmem [#allocation4], %s439
        %p441 = pneg %p74
        %p442 = pneg %p71
        %s443 = sand.u32 %s39, 1
        %s444 = scalar_lea.sflag [#allocation8], %s443
        %s445 = sand.u32 %s87, 1
        %s446 = smul.addr %s445, 4
        %s447 = scalar_lea.vmem [#allocation7], %s446
        %p448 = pneg %p100
        %p449 = pneg %p97
        %s450 = sand.u32 %s39, 1
        %s451 = scalar_lea.sflag [#allocation8], %s450
        %s452 = sand.u32 %s113, 1
        %s453 = smul.addr %s452, 4
        %s454 = scalar_lea.vmem [#allocation9], %s453
        %p455 = pneg %p126
        %p456 = pneg %p123
        %p457 = pneg %p147
        %p458 = pneg %p144
        %p459 = pneg %p168
        %p460 = pneg %p165
        %p461 = pneg %p189
        %p462 = pneg %p186
        %p463 = pneg %p210
        %p464 = pneg %p207
        %p465 = pneg %p231
        %p466 = pneg %p228
        %p467 = pneg %p259
        %p468 = pneg %p256
        %s469 = sand.u32 %s246, 1
        %s470 = scalar_lea.sflag [#allocation6], %s469
        %s471 = sand.u32 %s246, 1
        %s472 = smul.addr %s471, 8
        %s473 = scalar_lea.vmem [#allocation15], %s472
        %v475 = vld [vmem:[%s395] sm:$0xf]
        %v476 = vld [vmem:[#allocation10] sm:$0xf]
        %v477 = vld [vmem:[#allocation10 + $0x4] sm:$0xf]
        %v478 = vld [vmem:[#allocation10 + $0x8] sm:$0xf]
        %v479 = vld [vmem:[#allocation10 + $0xc] sm:$0xf]
        %v480 = vld [vmem:[%s5] sm:$0x1]
        %v482 = vperm.slane %v480, 0
        %v488 = vunpack.c.l.b16 %v476
        %v489 = vunpack.c.l.b16 %v477
        %v490 = vunpack.c.l.b16 %v478
        %v491 = vunpack.c.l.b16 %v479
        %v492 = vpack.c.b16 %v489, %v488
        %v493 = vpack.c.b16 %v491, %v490
        %vm496 = vcmask 261120
        %v498 = vsel %vm496, %v475, 0
        %500 = vmatpush.bf16.msra.mxu0 0
        %501 = vmatpush.bf16.msra.mxu0 0
        %502 = vmatpush.bf16.msra.mxu0 0
        %503 = vmatpush.bf16.msra.mxu0 0
        %504 = vmatpush.bf16.msra.mxu0 0
        %505 = vmatpush.bf16.msra.mxu0 0
        %506 = vmatpush.bf16.msra.mxu0 %v493
        %507 = vmatpush.bf16.msra.mxu0 %v492
        %508 = vmatmul.bf16.gmra.mxu0 %v498
        %v509 = vpop.f32.mrf.mxu0
        %v510 = vadd.f32 %v482, %v509
        %v511 = vpop.f32.mrf.mxu0
        %512 = vdwg.mxu0
        %v513 = vmul.f32 %v510, 0.25
        %v514 = vld [vmem:[%s405] sm:$0xf]
        %v515 = vld [vmem:[#allocation12] sm:$0xf]
        %v516 = vld [vmem:[#allocation12 + $0x4] sm:$0xf]
        %v517 = vld [vmem:[#allocation12 + $0x8] sm:$0xf]
        %v518 = vld [vmem:[#allocation12 + $0xc] sm:$0xf]
        %v523 = vunpack.c.l.b16 %v515
        %v524 = vunpack.c.l.b16 %v516
        %v525 = vunpack.c.l.b16 %v517
        %v526 = vunpack.c.l.b16 %v518
        %v527 = vpack.c.b16 %v524, %v523
        %v528 = vpack.c.b16 %v526, %v525
        %v532 = vsel %vm496, %v514, 0
        %534 = vmatpush.bf16.msra.mxu0 0
        %535 = vmatpush.bf16.msra.mxu0 0
        %536 = vmatpush.bf16.msra.mxu0 0
        %537 = vmatpush.bf16.msra.mxu0 0
        %538 = vmatpush.bf16.msra.mxu0 0
        %539 = vmatpush.bf16.msra.mxu0 0
        %540 = vmatpush.bf16.msra.mxu0 %v528
        %541 = vmatpush.bf16.msra.mxu0 %v527
        %542 = vmatmul.bf16.gmra.mxu0 %v532
        %v543 = vpop.f32.mrf.mxu0
        %v544 = vadd.f32 0.0, %v543
        %v545 = vpop.f32.mrf.mxu0
        %546 = vdwg.mxu0
        %v547 = vld [vmem:[%s415] sm:$0xf]
        %v548 = vld [vmem:[#allocation13] sm:$0xf]
        %v549 = vld [vmem:[#allocation13 + $0x4] sm:$0xf]
        %v550 = vld [vmem:[#allocation13 + $0x8] sm:$0xf]
        %v551 = vld [vmem:[#allocation13 + $0xc] sm:$0xf]
        %v552 = vld [vmem:[%s8] sm:$0x1]
        %v554 = vperm.slane %v552, 0
        %v560 = vunpack.c.l.b16 %v548
        %v561 = vunpack.c.l.b16 %v549
        %v562 = vunpack.c.l.b16 %v550
        %v563 = vunpack.c.l.b16 %v551
        %v564 = vpack.c.b16 %v561, %v560
        %v565 = vpack.c.b16 %v563, %v562
        %v569 = vsel %vm496, %v547, 0
        %571 = vmatpush.bf16.msra.mxu0 0
        %572 = vmatpush.bf16.msra.mxu0 0
        %573 = vmatpush.bf16.msra.mxu0 0
        %574 = vmatpush.bf16.msra.mxu0 0
        %575 = vmatpush.bf16.msra.mxu0 0
        %576 = vmatpush.bf16.msra.mxu0 0
        %577 = vmatpush.bf16.msra.mxu0 %v565
        %578 = vmatpush.bf16.msra.mxu0 %v564
        %579 = vmatmul.bf16.gmra.mxu0 %v569
        %v580 = vpop.f32.mrf.mxu0
        %v581 = vadd.f32 %v554, %v580
        %v582 = vpop.f32.mrf.mxu0
        %583 = vdwg.mxu0
        %v584 = vpack.c.bf16 %v513, %v513
        %v585 = vpack.c.bf16 %v544, %v544
        %586 = vmatpush.bf16.xpose.msra.mxu0 0
        %587 = vmatpush.bf16.xpose.msra.mxu0 0
        %588 = vmatpush.bf16.xpose.msra.mxu0 0
        %589 = vmatpush.bf16.xpose.msra.mxu0 0
        %590 = vmatpush.bf16.xpose.msra.mxu0 0
        %591 = vmatpush.bf16.xpose.msra.mxu0 0
        %592 = vmatpush.bf16.xpose.msra.mxu0 0
        %593 = vmatpush.bf16.xpose.msra.mxu0 %v585
        %594 = vmatmul.bf16.gmra.mxu0 %v584
        %v595 = vpop.f32.mrf.mxu0
        %v596 = vadd.f32 0.0, %v595
        %v597 = vpop.f32.mrf.mxu0
        %598 = vdwg.mxu0
        %s599 = smul.u32 %s44, 8
        %v600 = vlaneseq
        %v601 = vshrl.u32 %v600, 7
        %v602 = vstv %s599
        %v603 = vadd.s32 %v602, %v601
        %v604 = vlaneseq
        %v605 = vand.u32 %v604, 127
        %vm606 = vcmp.le.s32.totalorder %v605, %v603
        %s607 = sld [smem:[#allocation3]]
        %v608 = vstv %s607
        %vm609 = vcmp.eq.s32.totalorder %v605, %v608
        %vm610 = vmor %vm606, %vm609
        %vm611 = vcmp.eq.s32.totalorder %v603, %v608
        %vm612 = vmor %vm610, %vm611
        %s613 = sld [smem:[#allocation3 + $0x1]]
        %v614 = vstv %s613
        %vm615 = vcmp.eq.s32.totalorder %v605, %v614
        %vm616 = vmor %vm612, %vm615
        %vm617 = vcmp.eq.s32.totalorder %v603, %v614
        %vm618 = vmor %vm616, %vm617
        %v619 = vsel %vm618, %v596, -inf
        %vm620 = vcmask 64512
        %v621 = vsel %vm620, %v619, -inf
        %622 = vmax.xlane.f32.xlu0 %v621
        %v623 = vpop.xlane.xlu0 %622
        %v624 = vsub.f32 %v619, %v623
        %v625 = vmul.f32 %v624, 1.442695
        %v626 = vpow.pop %v625
        %v627 = vsel %vm620, %v626, 0.0
        %628 = vadd.xlane.f32.xlu0 %v627
        %v629 = vpop.xlane.xlu0 %628
        %v630 = vpack.c.bf16 %v626, %v626
        %v631 = vpack.c.bf16 %v581, %v581
        %v633 = vsel %vm620, %v630, 0
        %vm635 = vcmask 1043456
        %v637 = vsel %vm635, %v631, 0
        %639 = vmatpush.bf16.msra.mxu0 0
        %640 = vmatpush.bf16.msra.mxu0 0
        %641 = vmatpush.bf16.msra.mxu0 0
        %642 = vmatpush.bf16.msra.mxu0 0
        %643 = vmatpush.bf16.msra.mxu0 0
        %644 = vmatpush.bf16.msra.mxu0 0
        %645 = vmatpush.bf16.msra.mxu0 0
        %646 = vmatpush.bf16.msra.mxu0 %v637
        %647 = vmatmul.bf16.gmra.mxu0 %v633
        %v648 = vpop.f32.mrf.mxu0
        %v649 = vadd.f32 0.0, %v648
        %v650 = vpop.f32.mrf.mxu0
        %651 = vdwg.mxu0
        %v652 = vrcp.pop %v629
        %v653 = vmul.f32 %v649, %v652
        %654 = vst [vmem:[%s473] sm:$0xff] %v653
        %s655 = sand.u32 %s246, 1
        %s656 = scalar_lea.sflag [#allocation6], %s655
        %s657 = sand.u32 %s246, 1
        %s658 = smul.addr %s657, 8
        %s659 = scalar_lea.vmem [#allocation15], %s658
        // Predicated region
        $region77: #{tpu_custom_call.1} parent=51 // pred_check
          %p660 = pneg %p256
        $region78: #{tpu_custom_call.1} parent=51 // pred_check_branch
          %662 = sbr.rel (%p660) target = $region80
        $region79: #{tpu_custom_call.1} parent=51 // pred_region
          %664 = vsyncadd %s656, 0
          %s665 = sadd.s32 %s44, %s43
          %s666 = smul.addr %s665, 8
          %s667 = scalar_lea.hbm %s9, %s666
          %s669 = sshll.u32 %s659, 4
          %s670 = int_to_ptr.vmem [resolvable:$true] %s669
          %s671 = sshll.u32 %s667, 4
          %s672 = int_to_ptr.hbm [resolvable:$true] %s671
          %674 = dma.vmem_to_hbm [thread:$0]  %s670, 128, %s672, %s656
        $region80: #{tpu_custom_call.1} parent=51 // pred_fallthru
          _
      $region52: #{tpu_custom_call.1} parent=5 // pred_fallthru
        _
      %p675 = scmp.le.s32.totalorder 2, %s34
      // Predicated region
      $region81: #{tpu_custom_call.1} parent=5 // pred_check
        %p676 = pneg %p675
      $region82: #{tpu_custom_call.1} parent=5 // pred_check_branch
        %678 = sbr.rel (%p676) target = $region84
      $region83: #{tpu_custom_call.1} parent=5 // pred_region
        %s679 = ssub.s32 %s34, 2
        // Predicated region
        $region85: #{tpu_custom_call.1} parent=83 // pred_check
          %p680 = pneg %p262
        $region86: #{tpu_custom_call.1} parent=83 // pred_check_branch
          %682 = sbr.rel (%p680) target = $region88
        $region87: #{tpu_custom_call.1} parent=83 // pred_region
          %s683 = sand.u32 %s247, 1
          %s684 = scalar_lea.sflag [#allocation6], %s683
          %s685 = sand.u32 %s247, 1
          %s686 = smul.addr %s685, 8
          %s687 = scalar_lea.vmem [#allocation15], %s686
          %689 = dma.done %s684, 128
        $region88: #{tpu_custom_call.1} parent=83 // pred_fallthru
          _
      $region84: #{tpu_custom_call.1} parent=5 // pred_fallthru
        _
    $region6: #{tpu_custom_call.1} parent=1 // loop_footer
      %s38 = sadd.s32 1, %s34
    $region7: #{tpu_custom_call.1} parent=1 // loop_footer_branch
      %33 = sbr.rel target = $region3
    $region8: #{tpu_custom_call.1} parent=1 // loop_exit
      _
    %690 = vsyncpa [#allocation5], 1
    %s691 = scalar_lea.sflag [#allocation5], 1
    %692 = vsyncpa %s691, 1
    %693 = vsyncpa [#allocation8], 1
    %s694 = scalar_lea.sflag [#allocation8], 1
    %695 = vsyncpa %s694, 1
    %696 = vsyncpa [#allocation11], 1
    %697 = vsyncpa [#allocation14], 1
    %698 = vsyncpa [#allocation6], 1
    %s699 = scalar_lea.sflag [#allocation6], 1
    %700 = vsyncpa %s699, 1

</llo_original>
